<compile_context>
chip_gen: v7x
topology: tpu7x:2x2x1
jax: 0.10.0
libtpu: 0.0.40
codegen_flags: <defaults>
</compile_context>

<pallas_src>
import functools

import jax
import jax.numpy as jnp
from jax.experimental import pallas as pl
from jax.experimental.pallas import tpu as pltpu


def _round_up(x, m):
    return ((x + m - 1) // m) * m


# ---------------------------------------------------------------------------
# Fused kernel:
#   grid = (B, n_spatial_tiles)
#   x_ref    : (1, row_tile, C_in)   one batch element, one spatial tile
#   cw_ref   : (C_in, C_f)           1x1 conv weight   (resident in VMEM)
#   cb_ref   : (1, C_f)              conv bias
#   lw_ref   : (C_f, N_pad)          linear weight, lane-padded to 128
#   lb_ref   : (1, N_pad)            linear bias, lane-padded
#   o_ref    : (1, 1, N_pad)         logits for this batch element
#   acc_ref  : (1, C_f) f32 scratch  running sum of ReLU(x @ cw + cb)
# ---------------------------------------------------------------------------
def fused_kernel(x_ref, cw_ref, cb_ref, lw_ref, lb_ref, o_ref, acc_ref,
                 *, hw, inv_hw):
    s = pl.program_id(1)

    @pl.when(s == 0)
    def _init():
        acc_ref[...] = jnp.zeros_like(acc_ref)

    x_blk = x_ref[0]                                   # (row_tile, C_in)
    # NOTE: C_in may be tiny (4 in the test) -> MXU underutilized here; at
    # real backbone widths the contraction dim is MXU-shaped.  Kernel makes
    # no alignment assumption on C_in (it is the full last dim of the block).
    y = jnp.dot(x_blk, cw_ref[...], preferred_element_type=jnp.float32)
    y = jnp.maximum(y + cb_ref[...], 0.0)              # bias + ReLU, f32

    # Mask spatial-padding rows (zero-padded inputs still yield ReLU(bias)).
    tile_rows = x_blk.shape[0]
    row_ids = s * tile_rows + jax.lax.broadcasted_iota(
        jnp.int32, (tile_rows, 1), 0)
    y = jnp.where(row_ids < hw, y, 0.0)

    # Running pooled sum (global average pool, numerator).
    acc_ref[...] += jnp.sum(y, axis=0, keepdims=True)

    @pl.when(s == pl.num_programs(1) - 1)
    def _finalize():
        pooled = acc_ref[...] * inv_hw                 # (1, C_f)  == avgpool
        # TODO(synk): Dropout (p=0.3) is identity in eval mode.
        logits = jnp.dot(pooled, lw_ref[...],
                         preferred_element_type=jnp.float32)
        logits = logits + lb_ref[...]                  # (1, N_pad)
        o_ref[...] = logits.reshape(o_ref.shape).astype(o_ref.dtype)


def model_forward(x_nchw, conv_w, conv_b, lin_w, lin_b, *, row_tile=None):
    """x_nchw: (B, C_in, H, W) f32.  Returns logits (B, num_classes) f32."""
    B, C_in, H, W = x_nchw.shape
    C_f = conv_w.shape[1]
    num_classes = lin_w.shape[1]
    S = H * W

    # Row-tile over the H*W axis: multiple of 8, capped by padded extent.
    if row_tile is None:
        row_tile = 512
    row_tile = min(_round_up(row_tile, 8), _round_up(S, 8))
    n_tiles = pl.cdiv(S, row_tile)
    s_pad = n_tiles * row_tile

    # NCHW -> (B, H*W, C_in): layout plumbing so the 1x1 conv is a plain
    # (rows, C_in) @ (C_in, C_f) matmul.  Minor at small C_in.
    x_bsc = jnp.transpose(x_nchw, (0, 2, 3, 1)).reshape(B, S, C_in)
    if s_pad != S:
        x_bsc = jnp.pad(x_bsc, ((0, 0), (0, s_pad - S), (0, 0)))

    # Lane-dense classifier: pad num_classes up to 128, slice after the call.
    n_pad = _round_up(num_classes, 128)
    lin_w_p = jnp.pad(lin_w, ((0, 0), (0, n_pad - num_classes)))
    lin_b_p = jnp.pad(lin_b.reshape(1, -1), ((0, 0), (0, n_pad - num_classes)))
    conv_b2 = conv_b.reshape(1, -1)

    kernel = functools.partial(fused_kernel, hw=S, inv_hw=1.0 / float(S))

    out = pl.pallas_call(
        kernel,
        out_shape=jax.ShapeDtypeStruct((B, 1, n_pad), jnp.float32),
        grid_spec=pltpu.PrefetchScalarGridSpec(
            num_scalar_prefetch=0,
            grid=(B, n_tiles),
            in_specs=[
                pl.BlockSpec((1, row_tile, C_in), lambda b, s: (b, s, 0)),
                pl.BlockSpec((C_in, C_f), lambda b, s: (0, 0)),
                pl.BlockSpec((1, C_f), lambda b, s: (0, 0)),
                pl.BlockSpec((C_f, n_pad), lambda b, s: (0, 0)),
                pl.BlockSpec((1, n_pad), lambda b, s: (0, 0)),
            ],
            out_specs=pl.BlockSpec((1, 1, n_pad), lambda b, s: (b, 0, 0)),
            scratch_shapes=[pltpu.VMEM((1, C_f), jnp.float32)],
        ),
        compiler_params=pltpu.CompilerParams(
            # batch axis -> megacore sharding on v7x; reduction axis sequential.
            dimension_semantics=("parallel", "arbitrary"),
            # Tiles (row_tile*C_in + weights + acc) stay far below this even
            # at backbone scale; safe on v7x's 64 MiB physical VMEM.
            vmem_limit_bytes=32 * 1024 * 1024,
        ),
    )(x_bsc, conv_w, conv_b2, lin_w_p, lin_b_p)

    return out.reshape(B, n_pad)[:, :num_classes]


if __name__ == "__main__":
    # Small shapes consistent with the module's forward pass.
    B, C_in, H, W = 2, 4, 16, 16
    module_out_size = 32          # C_f (stands in for the default 1280)
    num_classes = 10

    key = jax.random.PRNGKey(0)
    kx, kw1, kb1, kw2, kb2 = jax.random.split(key, 5)

    x = jax.random.normal(kx, (B, C_in, H, W), dtype=jnp.float32)

    # Deterministic parameters (synthetic init, no checkpoint).
    conv_w = jax.random.normal(kw1, (C_in, module_out_size), jnp.float32) * 0.1
    conv_b = jax.random.normal(kb1, (module_out_size,), jnp.float32) * 0.01
    lin_w = jax.random.normal(kw2, (module_out_size, num_classes), jnp.float32) * 0.1
    lin_b = jax.random.normal(kb2, (num_classes,), jnp.float32) * 0.01

    # row_tile=128 -> 2 spatial tiles per batch element, exercising the
    # accumulate / finalize (pl.when) paths of the fused reduction.
    logits = model_forward(x, conv_w, conv_b, lin_w, lin_b, row_tile=128)
    jax.block_until_ready(logits)

    # Sanity check against a pure-JAX reference of the same math.
    feat_ref = jnp.maximum(
        jnp.einsum("bchw,cf->bhwf", x, conv_w) + conv_b, 0.0)
    pooled_ref = feat_ref.mean(axis=(1, 2))
    logits_ref = pooled_ref @ lin_w + lin_b
    assert logits.shape == (B, num_classes)
    assert jnp.allclose(logits, logits_ref, atol=1e-4, rtol=1e-4), "mismatch"

    print("KERNEL_OK")
</pallas_src>

<mosaic_0001>
module attributes {stable_mosaic.version = 11 : i64} {
  func.func @fused_kernel(%arg0: i32, %arg1: i32, %arg2: memref<1x128x4xf32, #tpu.memory_space<vmem>>, %arg3: memref<4x32xf32, #tpu.memory_space<vmem>>, %arg4: memref<1x32xf32, #tpu.memory_space<vmem>>, %arg5: memref<32x128xf32, #tpu.memory_space<vmem>>, %arg6: memref<1x128xf32, #tpu.memory_space<vmem>>, %arg7: memref<1x1x128xf32, #tpu.memory_space<vmem>>, %arg8: memref<1x32xf32, #tpu.memory_space<vmem>>) attributes {dimension_semantics = [#tpu.dimension_semantics<parallel>, #tpu.dimension_semantics<arbitrary>], iteration_bounds = array<i64: 2, 2>, scalar_prefetch = 0 : i64, scratch_operands = 1 : i64, tpu.core_type = #tpu.core_type<tc>, window_params = [{transform_indices = @transform_0, window_bounds = array<i64: 1, 128, 4>}, {pipeline_mode = #tpu.pipeline_mode<synchronous>, transform_indices = @transform_1, window_bounds = array<i64: 4, 32>}, {pipeline_mode = #tpu.pipeline_mode<synchronous>, transform_indices = @transform_2, window_bounds = array<i64: 1, 32>}, {pipeline_mode = #tpu.pipeline_mode<synchronous>, transform_indices = @transform_3, window_bounds = array<i64: 32, 128>}, {pipeline_mode = #tpu.pipeline_mode<synchronous>, transform_indices = @transform_4, window_bounds = array<i64: 1, 128>}, {transform_indices = @transform_5, window_bounds = array<i64: 1, 1, 128>}]} {
    %c0_i32 = arith.constant 0 : i32
    %0 = arith.cmpi eq, %arg1, %c0_i32 : i32
    %1 = arith.extui %0 : i1 to i32
    %c0_i32_0 = arith.constant 0 : i32
    %2 = arith.cmpi ne, %1, %c0_i32_0 : i32
    scf.if %2 {
      %cst_15 = arith.constant 0.000000e+00 : f32
      %30 = vector.broadcast %cst_15 : f32 to vector<1x32xf32>
      %c0_16 = arith.constant 0 : index
      %c0_17 = arith.constant 0 : index
      %31 = vector.load %arg8[%c0_16, %c0_17] : memref<1x32xf32, #tpu.memory_space<vmem>>, vector<1x32xf32>
      tpu.vector_store %arg8[%c0_16, %c0_17], %30 {strides = array<i32>} : memref<1x32xf32, #tpu.memory_space<vmem>>, vector<1x32xf32>,
    } else {
    }
    %c0 = arith.constant 0 : index
    %c0_1 = arith.constant 0 : index
    %c0_2 = arith.constant 0 : index
    %3 = vector.load %arg2[%c0, %c0_1, %c0_2] : memref<1x128x4xf32, #tpu.memory_space<vmem>>, vector<1x128x4xf32>
    %4 = vector.shape_cast %3 : vector<1x128x4xf32> to vector<128x4xf32>
    %c0_3 = arith.constant 0 : index
    %c0_4 = arith.constant 0 : index
    %5 = vector.load %arg3[%c0_3, %c0_4] : memref<4x32xf32, #tpu.memory_space<vmem>>, vector<4x32xf32>
    %cst = arith.constant dense<0.000000e+00> : vector<128x32xf32>
    %6 = tpu.matmul %4, %5, %cst {dimension_numbers = #tpu.dot_dimension_numbers<[1], [0], [0], [1], [0, 0, 1, 1], [], []>} : vector<128x4xf32>, vector<4x32xf32>, vector<128x32xf32> -> vector<128x32xf32>
    %c0_5 = arith.constant 0 : index
    %c0_6 = arith.constant 0 : index
    %7 = vector.load %arg4[%c0_5, %c0_6] : memref<1x32xf32, #tpu.memory_space<vmem>>, vector<1x32xf32>
    %8 = vector.broadcast %7 : vector<1x32xf32> to vector<128x32xf32>
    %9 = arith.addf %6, %8 : vector<128x32xf32>
    %cst_7 = arith.constant 0.000000e+00 : f32
    %10 = vector.broadcast %cst_7 : f32 to vector<128x32xf32>
    %11 = arith.maximumf %9, %10 : vector<128x32xf32>
    %c128_i32 = arith.constant 128 : i32
    %12 = arith.muli %arg1, %c128_i32 : i32
    %13 = tpu.iota {dimensions = array<i32: 0>} : vector<128x1xi32>
    %14 = vector.broadcast %12 : i32 to vector<128x1xi32>
    %15 = arith.addi %14, %13 : vector<128x1xi32>
    %c256_i32 = arith.constant 256 : i32
    %16 = vector.broadcast %c256_i32 : i32 to vector<128x1xi32>
    %17 = arith.cmpi slt, %15, %16 : vector<128x1xi32>
    %cst_8 = arith.constant 0.000000e+00 : f32
    %18 = vector.shape_cast %17 : vector<128x1xi1> to vector<128x1xi1>
    %19 = vector.broadcast %18 : vector<128x1xi1> to vector<128x32xi1>
    %20 = vector.broadcast %cst_8 : f32 to vector<128x32xf32>
    %21 = arith.select %19, %11, %20 : vector<128x32xi1>, vector<128x32xf32>
    %c0_9 = arith.constant 0 : index
    %c0_10 = arith.constant 0 : index
    %22 = vector.load %arg8[%c0_9, %c0_10] : memref<1x32xf32, #tpu.memory_space<vmem>>, vector<1x32xf32>
    %cst_11 = arith.constant dense<0.000000e+00> : vector<32xf32>
    %23 = vector.multi_reduction <add>, %21, %cst_11 [0] : vector<128x32xf32> to vector<32xf32>
    %24 = vector.shape_cast %23 : vector<32xf32> to vector<1x32xf32>
    %25 = arith.addf %22, %24 : vector<1x32xf32>
    %c0_12 = arith.constant 0 : index
    %c0_13 = arith.constant 0 : index
    %26 = vector.load %arg8[%c0_12, %c0_13] : memref<1x32xf32, #tpu.memory_space<vmem>>, vector<1x32xf32>
    tpu.vector_store %arg8[%c0_12, %c0_13], %25 {strides = array<i32>} : memref<1x32xf32, #tpu.memory_space<vmem>>, vector<1x32xf32>,
    %c1_i32 = arith.constant 1 : i32
    %27 = arith.cmpi eq, %arg1, %c1_i32 : i32
    %28 = arith.extui %27 : i1 to i32
    %c0_i32_14 = arith.constant 0 : i32
    %29 = arith.cmpi ne, %28, %c0_i32_14 : i32
    scf.if %29 {
      %c0_15 = arith.constant 0 : index
      %c0_16 = arith.constant 0 : index
      %30 = vector.load %arg8[%c0_15, %c0_16] : memref<1x32xf32, #tpu.memory_space<vmem>>, vector<1x32xf32>
      %cst_17 = arith.constant 3.906250e-03 : f32
      %31 = vector.broadcast %cst_17 : f32 to vector<1x32xf32>
      %32 = arith.mulf %30, %31 : vector<1x32xf32>
      %c0_18 = arith.constant 0 : index
      %c0_19 = arith.constant 0 : index
      %33 = vector.load %arg5[%c0_18, %c0_19] : memref<32x128xf32, #tpu.memory_space<vmem>>, vector<32x128xf32>
      %cst_20 = arith.constant dense<0.000000e+00> : vector<1x128xf32>
      %34 = tpu.matmul %32, %33, %cst_20 {dimension_numbers = #tpu.dot_dimension_numbers<[1], [0], [0], [1], [0, 0, 1, 1], [], []>} : vector<1x32xf32>, vector<32x128xf32>, vector<1x128xf32> -> vector<1x128xf32>
      %c0_21 = arith.constant 0 : index
      %c0_22 = arith.constant 0 : index
      %35 = vector.load %arg6[%c0_21, %c0_22] : memref<1x128xf32, #tpu.memory_space<vmem>>, vector<1x128xf32>
      %36 = arith.addf %34, %35 : vector<1x128xf32>
      %37 = vector.shape_cast %36 : vector<1x128xf32> to vector<1x1x128xf32>
      %c0_23 = arith.constant 0 : index
      %c0_24 = arith.constant 0 : index
      %c0_25 = arith.constant 0 : index
      %38 = vector.load %arg7[%c0_23, %c0_24, %c0_25] : memref<1x1x128xf32, #tpu.memory_space<vmem>>, vector<1x1x128xf32>
      tpu.vector_store %arg7[%c0_23, %c0_24, %c0_25], %37 {strides = array<i32>} : memref<1x1x128xf32, #tpu.memory_space<vmem>>, vector<1x1x128xf32>,
    } else {
    }
    return
  }
  func.func @transform_0(%arg0: i32, %arg1: i32) -> (i32, i32, i32) {
    %c0_i32 = arith.constant 0 : i32
    %c0_i32_0 = arith.constant 0 : i32
    return %arg0, %arg1, %c0_i32 : i32, i32, i32
  }
  func.func @transform_1(%arg0: i32, %arg1: i32) -> (i32, i32) {
    %c0_i32 = arith.constant 0 : i32
    %c0_i32_0 = arith.constant 0 : i32
    %c0_i32_1 = arith.constant 0 : i32
    return %c0_i32, %c0_i32_0 : i32, i32
  }
  func.func @transform_2(%arg0: i32, %arg1: i32) -> (i32, i32) {
    %c0_i32 = arith.constant 0 : i32
    %c0_i32_0 = arith.constant 0 : i32
    %c0_i32_1 = arith.constant 0 : i32
    return %c0_i32, %c0_i32_0 : i32, i32
  }
  func.func @transform_3(%arg0: i32, %arg1: i32) -> (i32, i32) {
    %c0_i32 = arith.constant 0 : i32
    %c0_i32_0 = arith.constant 0 : i32
    %c0_i32_1 = arith.constant 0 : i32
    return %c0_i32, %c0_i32_0 : i32, i32
  }
  func.func @transform_4(%arg0: i32, %arg1: i32) -> (i32, i32) {
    %c0_i32 = arith.constant 0 : i32
    %c0_i32_0 = arith.constant 0 : i32
    %c0_i32_1 = arith.constant 0 : i32
    return %c0_i32, %c0_i32_0 : i32, i32
  }
  func.func @transform_5(%arg0: i32, %arg1: i32) -> (i32, i32, i32) {
    %c0_i32 = arith.constant 0 : i32
    %c0_i32_0 = arith.constant 0 : i32
    %c0_i32_1 = arith.constant 0 : i32
    return %arg0, %c0_i32, %c0_i32_0 : i32, i32, i32
  }
}

</mosaic_0001>

<llo_original>
// kernel: tpu_custom_call.1
$region0: #{tpu_custom_call.1}
  #allocation0 [shape = 'u32[]', space=smem, size = 0x4, offset = 0x4, fixed_abs, tag = 'smem constant byte address 0x4 - core index']
  #allocation1 [shape = 'u32[144,128]{1,0:T(1,128)}', space=vmem, size = 0x12000, scoped, tag = 'internal scratch']
  #allocation2 [shape = 'f32[1,32]{1,0:T(1,128)}', space=vmem, size = 0x200, scoped, tag = 'scratch operand']
  %s0 = inlined_call_operand.vmem [shape: f32[2,256,4], index: 0, kind: input, shape index: {}]
  %s1 = inlined_call_operand.vmem [shape: f32[4,32], index: 1, kind: input, shape index: {}]
  %s2 = inlined_call_operand.vmem [shape: f32[1,32], index: 2, kind: input, shape index: {}]
  %s3 = inlined_call_operand.vmem [shape: f32[32,128], index: 3, kind: input, shape index: {}]
  %s4 = inlined_call_operand.vmem [shape: f32[1,128], index: 4, kind: input, shape index: {}]
  %s5 = inlined_call_operand.hbm [shape: f32[2,1,128], index: 5, kind: output, shape index: {}]
  %s6 = sld [smem:[#allocation0]]
  $region61: #{tpu_custom_call.1} parent=0
    _
  %s8 = ssub.s32 1, %s6
  %s9 = scalar_select 0, %s8, %s6
  $region1: #{tpu_custom_call.1} parent=0
    #allocation3 [shape = 'u8[1024]{0}', space=vmem, size = 0x400, scoped, tag = 'output window, operand 0']
    #allocation4 [shape = 's32[2]{0}', space=sflag, size = 0x8, scoped, tag = 'scoped memory for tpu_custom_call.1']
    %10 = vsyncpa [#allocation4], 0
    %s11 = scalar_lea.sflag [#allocation4], 1
    %12 = vsyncpa %s11, 0
    loop: start=0, step=1, limit=6
    $region2: #{tpu_custom_call.1} parent=1 // loop_pre_header
      _
    $region3: #{tpu_custom_call.1} parent=1 // loop_header
      %s14 = sphi 0, %s18
      %p15 = scmp.ge.s32.totalorder %s14, 6
      %s21 = sphi 0, %s33
      %s22 = sphi 0, %s29
      %s23 = sphi 0, %s21
      %s24 = sphi 0, %s22
      %s25 = sphi 0, %s23
      %s26 = sphi 0, %s24
      %s38 = sphi 0, %s40
      %s41 = sphi 0, %s38
      %s42 = sphi 0, %s41
      %s58 = sphi 0, %s42
      %s62 = sphi 0, %s62
      %s64 = sphi 0, %s62
      %s65 = sphi 0, %s64
      %s79 = sphi 0, %s65
      %s83 = sphi 0, %s83
      %s85 = sphi 0, %s83
      %s86 = sphi 0, %s85
      %s100 = sphi 0, %s86
      %s104 = sphi 0, %s104
      %s106 = sphi 0, %s104
      %s107 = sphi 0, %s106
      %s121 = sphi 0, %s107
      %s125 = sphi 0, %s125
      %s127 = sphi 0, %s125
      %s128 = sphi 0, %s127
      %s142 = sphi 0, %s128
      %s148 = sphi 0, %s150
      %s151 = sphi 0, %s148
      %s152 = sphi 0, %s151
      %s168 = sphi 0, %s152
    $region4: #{tpu_custom_call.1} parent=1 // loop_header_branch
      %17 = sbr.rel (%p15) target = $region8
    $region5: #{tpu_custom_call.1} parent=1 // loop_body
      %s19 = ssub.s32 %s14, 1
      %s20 = ssub.s32 %s14, 2
      %s27 = sadd.s32 1, %s22
      %p28 = scmp.ge.s32.totalorder %s27, 2
      %s29 = scalar_select %p28, 0, %s27
      %s30 = sadd.s32 1, %s21
      %s31 = scalar_select %p28, %s30, %s21
      %p32 = scmp.ge.s32.totalorder %s31, 2
      %s33 = scalar_select %p32, 0, %s31
      %s34 = ssub.s32 %s21, %s33
      %s35 = ssub.s32 %s22, %s29
      %s36 = sor.u32 %s34, %s35
      %p37 = scmp.eq.s32.totalorder %s36, 0
      %s39 = sadd.s32 %s38, 1
      %s40 = scalar_select %p37, %s38, %s39
      %p43 = pneg %p37
      %p44 = scmp.eq.s32.totalorder %s14, 3
      %p45 = por %p43, %p44
      %p46 = scmp.ne.s32.totalorder %s38, %s41
      %p47 = scmp.eq.s32.totalorder %s14, 0
      %p48 = por %p46, %p47
      %p49 = scmp.ne.s32.totalorder %s38, %s41
      %p50 = scmp.eq.s32.totalorder %s19, 3
      %p51 = por %p49, %p50
      %p52 = scmp.ne.s32.totalorder %s41, %s42
      %p53 = scmp.eq.s32.totalorder %s19, 0
      %p54 = por %p52, %p53
      %p55 = scmp.ne.s32.totalorder %s41, %s42
      %p56 = scmp.eq.s32.totalorder %s20, 3
      %p57 = por %p55, %p56
      %p59 = scmp.ne.s32.totalorder %s42, %s58
      %p60 = scmp.eq.s32.totalorder %s20, 0
      %p61 = por %p59, %p60
      %s63 = sadd.s32 %s62, 1
      %p66 = scmp.eq.s32.totalorder %s14, 3
      %p67 = scmp.ne.s32.totalorder %s62, %s64
      %p68 = scmp.eq.s32.totalorder %s14, 0
      %p69 = por %p67, %p68
      %p70 = scmp.ne.s32.totalorder %s62, %s64
      %p71 = scmp.eq.s32.totalorder %s19, 3
      %p72 = por %p70, %p71
      %p73 = scmp.ne.s32.totalorder %s64, %s65
      %p74 = scmp.eq.s32.totalorder %s19, 0
      %p75 = por %p73, %p74
      %p76 = scmp.ne.s32.totalorder %s64, %s65
      %p77 = scmp.eq.s32.totalorder %s20, 3
      %p78 = por %p76, %p77
      %p80 = scmp.ne.s32.totalorder %s65, %s79
      %p81 = scmp.eq.s32.totalorder %s20, 0
      %p82 = por %p80, %p81
      %s84 = sadd.s32 %s83, 1
      %p87 = scmp.eq.s32.totalorder %s14, 3
      %p88 = scmp.ne.s32.totalorder %s83, %s85
      %p89 = scmp.eq.s32.totalorder %s14, 0
      %p90 = por %p88, %p89
      %p91 = scmp.ne.s32.totalorder %s83, %s85
      %p92 = scmp.eq.s32.totalorder %s19, 3
      %p93 = por %p91, %p92
      %p94 = scmp.ne.s32.totalorder %s85, %s86
      %p95 = scmp.eq.s32.totalorder %s19, 0
      %p96 = por %p94, %p95
      %p97 = scmp.ne.s32.totalorder %s85, %s86
      %p98 = scmp.eq.s32.totalorder %s20, 3
      %p99 = por %p97, %p98
      %p101 = scmp.ne.s32.totalorder %s86, %s100
      %p102 = scmp.eq.s32.totalorder %s20, 0
      %p103 = por %p101, %p102
      %s105 = sadd.s32 %s104, 1
      %p108 = scmp.eq.s32.totalorder %s14, 3
      %p109 = scmp.ne.s32.totalorder %s104, %s106
      %p110 = scmp.eq.s32.totalorder %s14, 0
      %p111 = por %p109, %p110
      %p112 = scmp.ne.s32.totalorder %s104, %s106
      %p113 = scmp.eq.s32.totalorder %s19, 3
      %p114 = por %p112, %p113
      %p115 = scmp.ne.s32.totalorder %s106, %s107
      %p116 = scmp.eq.s32.totalorder %s19, 0
      %p117 = por %p115, %p116
      %p118 = scmp.ne.s32.totalorder %s106, %s107
      %p119 = scmp.eq.s32.totalorder %s20, 3
      %p120 = por %p118, %p119
      %p122 = scmp.ne.s32.totalorder %s107, %s121
      %p123 = scmp.eq.s32.totalorder %s20, 0
      %p124 = por %p122, %p123
      %s126 = sadd.s32 %s125, 1
      %p129 = scmp.eq.s32.totalorder %s14, 3
      %p130 = scmp.ne.s32.totalorder %s125, %s127
      %p131 = scmp.eq.s32.totalorder %s14, 0
      %p132 = por %p130, %p131
      %p133 = scmp.ne.s32.totalorder %s125, %s127
      %p134 = scmp.eq.s32.totalorder %s19, 3
      %p135 = por %p133, %p134
      %p136 = scmp.ne.s32.totalorder %s127, %s128
      %p137 = scmp.eq.s32.totalorder %s19, 0
      %p138 = por %p136, %p137
      %p139 = scmp.ne.s32.totalorder %s127, %s128
      %p140 = scmp.eq.s32.totalorder %s20, 3
      %p141 = por %p139, %p140
      %p143 = scmp.ne.s32.totalorder %s128, %s142
      %p144 = scmp.eq.s32.totalorder %s20, 0
      %p145 = por %p143, %p144
      %s146 = ssub.s32 %s21, %s33
      %p147 = scmp.eq.s32.totalorder %s146, 0
      %s149 = sadd.s32 %s148, 1
      %s150 = scalar_select %p147, %s148, %s149
      %p153 = pneg %p147
      %p154 = scmp.eq.s32.totalorder %s14, 3
      %p155 = por %p153, %p154
      %p156 = scmp.ne.s32.totalorder %s148, %s151
      %p157 = scmp.eq.s32.totalorder %s14, 0
      %p158 = por %p156, %p157
      %p159 = scmp.ne.s32.totalorder %s148, %s151
      %p160 = scmp.eq.s32.totalorder %s19, 3
      %p161 = por %p159, %p160
      %p162 = scmp.ne.s32.totalorder %s151, %s152
      %p163 = scmp.eq.s32.totalorder %s19, 0
      %p164 = por %p162, %p163
      %p165 = scmp.ne.s32.totalorder %s151, %s152
      %p166 = scmp.eq.s32.totalorder %s20, 3
      %p167 = por %p165, %p166
      %p169 = scmp.ne.s32.totalorder %s152, %s168
      %p170 = scmp.eq.s32.totalorder %s20, 0
      %p171 = por %p169, %p170
      %p172 = scmp.le.s32.totalorder 1, %s14
      %p173 = scmp.lt.s32.totalorder %s14, 5
      %p174 = pnand %p172, %p173
      %p175 = pneg %p174
      // Predicated region
      $region9: #{tpu_custom_call.1} parent=5 // pred_check
        _
      $region10: #{tpu_custom_call.1} parent=5 // pred_check_branch
        %177 = sbr.rel (%p174) target = $region12
      $region11: #{tpu_custom_call.1} parent=5 // pred_region
        %s178 = ssub.s32 %s14, 1
        // Predicated region
        $region13: #{tpu_custom_call.1} parent=11 // pred_check
          %p179 = pneg %p75
        $region14: #{tpu_custom_call.1} parent=11 // pred_check_branch
          %181 = sbr.rel (%p179) target = $region16
        $region15: #{tpu_custom_call.1} parent=11 // pred_region
          _
        $region16: #{tpu_custom_call.1} parent=11 // pred_fallthru
          _
        // Predicated region
        $region17: #{tpu_custom_call.1} parent=11 // pred_check
          %p182 = pneg %p96
        $region18: #{tpu_custom_call.1} parent=11 // pred_check_branch
          %184 = sbr.rel (%p182) target = $region20
        $region19: #{tpu_custom_call.1} parent=11 // pred_region
          _
        $region20: #{tpu_custom_call.1} parent=11 // pred_fallthru
          _
        // Predicated region
        $region21: #{tpu_custom_call.1} parent=11 // pred_check
          %p185 = pneg %p117
        $region22: #{tpu_custom_call.1} parent=11 // pred_check_branch
          %187 = sbr.rel (%p185) target = $region24
        $region23: #{tpu_custom_call.1} parent=11 // pred_region
          _
        $region24: #{tpu_custom_call.1} parent=11 // pred_fallthru
          _
        // Predicated region
        $region25: #{tpu_custom_call.1} parent=11 // pred_check
          %p188 = pneg %p138
        $region26: #{tpu_custom_call.1} parent=11 // pred_check_branch
          %190 = sbr.rel (%p188) target = $region28
        $region27: #{tpu_custom_call.1} parent=11 // pred_region
          _
        $region28: #{tpu_custom_call.1} parent=11 // pred_fallthru
          _
      $region12: #{tpu_custom_call.1} parent=5 // pred_fallthru
        _
      %p191 = scmp.lt.s32.totalorder %s14, 4
      // Predicated region
      $region29: #{tpu_custom_call.1} parent=5 // pred_check
        %p192 = pneg %p191
      $region30: #{tpu_custom_call.1} parent=5 // pred_check_branch
        %194 = sbr.rel (%p192) target = $region32
      $region31: #{tpu_custom_call.1} parent=5 // pred_region
        // Predicated region
        $region33: #{tpu_custom_call.1} parent=31 // pred_check
          %p195 = pneg %p48
        $region34: #{tpu_custom_call.1} parent=31 // pred_check_branch
          %197 = sbr.rel (%p195) target = $region36
        $region35: #{tpu_custom_call.1} parent=31 // pred_region
          %s198 = smul.u32 16, %s22
          %p199 = scmp.lt.s32.totalorder %s21, 1
          %s200 = scalar_select %p199, %s21, 1
          %p201 = scmp.lt.s32.totalorder %s198, 31
          %s202 = scalar_select %p201, %s198, 31
          %s203 = smul.addr %s200, 32
          %s204 = sadd.s32 %s202, %s203
          %s205 = smul.addr %s204, 8
          %s206 = scalar_lea.vmem %s0, %s205
          %s207 = smul.u32 16, %s22
        $region36: #{tpu_custom_call.1} parent=31 // pred_fallthru
          _
      $region32: #{tpu_custom_call.1} parent=5 // pred_fallthru
        _
      %p208 = scmp.le.s32.totalorder 1, %s14
      %p209 = scmp.lt.s32.totalorder %s14, 5
      %p210 = pnand %p208, %p209
      %p211 = pneg %p210
      // Predicated region
      $region37: #{tpu_custom_call.1} parent=5 // pred_check
        _
      $region38: #{tpu_custom_call.1} parent=5 // pred_check_branch
        %213 = sbr.rel (%p210) target = $region40
      $region39: #{tpu_custom_call.1} parent=5 // pred_region
        %s214 = ssub.s32 %s14, 1
        %s215 = smul.u32 16, %s24
        %p216 = scmp.lt.s32.totalorder %s23, 1
        %s217 = scalar_select %p216, %s23, 1
        %p218 = scmp.lt.s32.totalorder %s215, 31
        %s219 = scalar_select %p218, %s215, 31
        %s220 = smul.addr %s217, 32
        %s221 = sadd.s32 %s219, %s220
        %s222 = smul.addr %s221, 8
        %s223 = scalar_lea.vmem %s0, %s222
        %p224 = pneg %p54
        %p225 = pneg %p51
        %p226 = pneg %p75
        %p227 = pneg %p72
        %p228 = pneg %p96
        %p229 = pneg %p93
        %p230 = pneg %p117
        %p231 = pneg %p114
        %p232 = pneg %p138
        %p233 = pneg %p135
        %p234 = pneg %p164
        %p235 = pneg %p161
        %s236 = sand.u32 %s151, 1
        %s237 = scalar_lea.sflag [#allocation4], %s236
        %s238 = sand.u32 %s151, 1
        %s239 = scalar_lea.vmem [#allocation3], %s238
        %s240 = smul.u32 16, %s24
        %p241 = scmp.lt.s32.totalorder %s23, 1
        %s242 = scalar_select %p241, %s23, 1
        %p243 = scmp.lt.s32.totalorder %s240, 31
        %s244 = scalar_select %p243, %s240, 31
        %s245 = smul.addr %s242, 32
        %s246 = sadd.s32 %s244, %s245
        %s247 = smul.addr %s246, 8
        %s248 = scalar_lea.vmem %s0, %s247
        %s249 = smul.u32 16, %s24
        %p250 = scmp.eq.s32.totalorder %s24, 0
        // Predicated region
        $region41: #{tpu_custom_call.1} parent=39 // pred_check
          %p251 = pneg %p250
        $region42: #{tpu_custom_call.1} parent=39 // pred_check_branch
          %253 = sbr.rel (%p251) target = $region44
        $region43: #{tpu_custom_call.1} parent=39 // pred_region
          %vm254 = vcmask 253952
          %255 = vst.msk [vmem:[#allocation2] sm:$0x1] %vm254, 0.0
        $region44: #{tpu_custom_call.1} parent=39 // pred_fallthru
          _
        %v256 = vld [vmem:[%s248] sm:$0xff]
        %v257 = vld [vmem:[%s248 + $0x8] sm:$0xff]
        %v258 = vld [vmem:[%s248 + $0x10] sm:$0xff]
        %v259 = vld [vmem:[%s248 + $0x18] sm:$0xff]
        %v260 = vld [vmem:[%s248 + $0x20] sm:$0xff]
        %v261 = vld [vmem:[%s248 + $0x28] sm:$0xff]
        %v262 = vld [vmem:[%s248 + $0x30] sm:$0xff]
        %v263 = vld [vmem:[%s248 + $0x38] sm:$0xff]
        %v264 = vld [vmem:[%s248 + $0x40] sm:$0xff]
        %v265 = vld [vmem:[%s248 + $0x48] sm:$0xff]
        %v266 = vld [vmem:[%s248 + $0x50] sm:$0xff]
        %v267 = vld [vmem:[%s248 + $0x58] sm:$0xff]
        %v268 = vld [vmem:[%s248 + $0x60] sm:$0xff]
        %v269 = vld [vmem:[%s248 + $0x68] sm:$0xff]
        %v270 = vld [vmem:[%s248 + $0x70] sm:$0xff]
        %v271 = vld [vmem:[%s248 + $0x78] sm:$0xff]
        %v272 = vld [vmem:[%s1] sm:$0xf]
        %v273 = vld [vmem:[%s2] sm:$0x1]
        %v275 = vlaneseq
        %v276 = vshrl.u32 %v275, 7
        %v277 = vsub.s32 0, %v276
        %v278 = vrot.slane %v273, %v277
        %vm280 = vcmask 31744
        %v282 = vsel %vm280, %v256, 0
        %v285 = vsel %vm280, %v257, 0
        %v288 = vsel %vm280, %v258, 0
        %v291 = vsel %vm280, %v259, 0
        %v294 = vsel %vm280, %v260, 0
        %v297 = vsel %vm280, %v261, 0
        %v300 = vsel %vm280, %v262, 0
        %v303 = vsel %vm280, %v263, 0
        %v306 = vsel %vm280, %v264, 0
        %v309 = vsel %vm280, %v265, 0
        %v312 = vsel %vm280, %v266, 0
        %v315 = vsel %vm280, %v267, 0
        %v318 = vsel %vm280, %v268, 0
        %v321 = vsel %vm280, %v269, 0
        %v324 = vsel %vm280, %v270, 0
        %v327 = vsel %vm280, %v271, 0
        %vm329 = vcmask 1043456
        %v331 = vsel %vm329, %v272, 0
        %333 = vmatprep.subr.mxu0 0.0
        %334 = vmatpush1.msra.mxu0 %v331
        %335 = vmatprep.subr.mxu0 0.0
        %336 = vmatpush1.msra.mxu0 0.0
        %337 = vmatprep.subr.mxu0 0.0
        %338 = vmatpush1.msra.mxu0 0.0
        %339 = vmatprep.subr.mxu0 0.0
        %340 = vmatpush1.msra.mxu0 0.0
        %341 = vmatprep.subr.mxu0 0.0
        %342 = vmatpush1.msra.mxu0 0.0
        %343 = vmatprep.subr.mxu0 0.0
        %344 = vmatpush1.msra.mxu0 0.0
        %345 = vmatprep.subr.mxu0 0.0
        %346 = vmatpush1.msra.mxu0 0.0
        %347 = vmatprep.subr.mxu0 0.0
        %348 = vmatpush1.msra.mxu0 0.0
        %349 = vmatprep.subr.mxu0 0.0
        %350 = vmatpush1.msra.mxu0 0.0
        %351 = vmatprep.subr.mxu0 0.0
        %352 = vmatpush1.msra.mxu0 0.0
        %353 = vmatprep.subr.mxu0 0.0
        %354 = vmatpush1.msra.mxu0 0.0
        %355 = vmatprep.subr.mxu0 0.0
        %356 = vmatpush1.msra.mxu0 0.0
        %357 = vmatprep.subr.mxu0 0.0
        %358 = vmatpush1.msra.mxu0 0.0
        %359 = vmatprep.subr.mxu0 0.0
        %360 = vmatpush1.msra.mxu0 0.0
        %361 = vmatprep.subr.mxu0 0.0
        %362 = vmatpush1.msra.mxu0 0.0
        %363 = vmatprep.subr.mxu0 0.0
        %364 = vmatpush1.msra.mxu0 0.0
        %365 = vmatprep.subr.mxu0 0.0
        %366 = vmatpush1.msra.mxu0 0.0
        %367 = vmatprep.subr.mxu0 0.0
        %368 = vmatpush1.msra.mxu0 0.0
        %369 = vmatprep.subr.mxu0 0.0
        %370 = vmatpush1.msra.mxu0 0.0
        %371 = vmatprep.subr.mxu0 0.0
        %372 = vmatpush1.msra.mxu0 0.0
        %373 = vmatprep.subr.mxu0 0.0
        %374 = vmatpush1.msra.mxu0 0.0
        %375 = vmatprep.subr.mxu0 0.0
        %376 = vmatpush1.msra.mxu0 0.0
        %377 = vmatprep.subr.mxu0 0.0
        %378 = vmatpush1.msra.mxu0 0.0
        %379 = vmatprep.subr.mxu0 0.0
        %380 = vmatpush1.msra.mxu0 0.0
        %381 = vmatprep.subr.mxu0 0.0
        %382 = vmatpush1.msra.mxu0 0.0
        %383 = vmatprep.subr.mxu0 0.0
        %384 = vmatpush1.msra.mxu0 0.0
        %385 = vmatprep.subr.mxu0 0.0
        %386 = vmatpush1.msra.mxu0 0.0
        %387 = vmatprep.subr.mxu0 0.0
        %388 = vmatpush1.msra.mxu0 0.0
        %389 = vmatprep.subr.mxu0 0.0
        %390 = vmatpush1.msra.mxu0 0.0
        %391 = vmatprep.subr.mxu0 0.0
        %392 = vmatpush1.msra.mxu0 0.0
        %393 = vmatprep.subr.mxu0 0.0
        %394 = vmatpush1.msra.mxu0 0.0
        %395 = vmatprep.subr.mxu0 0.0
        %396 = vmatpush1.msra.mxu0 0.0
        %397 = vmatprep.mubr.f32.mxu0 0.0
        %398 = vmatmul.mubr.f32.gmra.mrb[0].mxu0 %v282
        %v399 = vpop.f32.mrb[0].mxu0
        %v400 = vadd.f32 %v278, %v399
        %v401 = vpop.f32.mrb[0].mxu0
        %402 = vmatprep.mubr.f32.mxu0 0.0
        %403 = vmatmul.mubr.f32.gmra.mrb[0].mxu0 %v285
        %v404 = vpop.f32.mrb[0].mxu0
        %v405 = vadd.f32 %v278, %v404
        %v406 = vpop.f32.mrb[0].mxu0
        %407 = vmatprep.mubr.f32.mxu0 0.0
        %408 = vmatmul.mubr.f32.gmra.mrb[0].mxu0 %v288
        %v409 = vpop.f32.mrb[0].mxu0
        %v410 = vadd.f32 %v278, %v409
        %v411 = vpop.f32.mrb[0].mxu0
        %412 = vmatprep.mubr.f32.mxu0 0.0
        %413 = vmatmul.mubr.f32.gmra.mrb[0].mxu0 %v291
        %v414 = vpop.f32.mrb[0].mxu0
        %v415 = vadd.f32 %v278, %v414
        %v416 = vpop.f32.mrb[0].mxu0
        %417 = vmatprep.mubr.f32.mxu0 0.0
        %418 = vmatmul.mubr.f32.gmra.mrb[0].mxu0 %v294
        %v419 = vpop.f32.mrb[0].mxu0
        %v420 = vadd.f32 %v278, %v419
        %v421 = vpop.f32.mrb[0].mxu0
        %422 = vmatprep.mubr.f32.mxu0 0.0
        %423 = vmatmul.mubr.f32.gmra.mrb[0].mxu0 %v297
        %v424 = vpop.f32.mrb[0].mxu0
        %v425 = vadd.f32 %v278, %v424
        %v426 = vpop.f32.mrb[0].mxu0
        %427 = vmatprep.mubr.f32.mxu0 0.0
        %428 = vmatmul.mubr.f32.gmra.mrb[0].mxu0 %v300
        %v429 = vpop.f32.mrb[0].mxu0
        %v430 = vadd.f32 %v278, %v429
        %v431 = vpop.f32.mrb[0].mxu0
        %432 = vmatprep.mubr.f32.mxu0 0.0
        %433 = vmatmul.mubr.f32.gmra.mrb[0].mxu0 %v303
        %v434 = vpop.f32.mrb[0].mxu0
        %v435 = vadd.f32 %v278, %v434
        %v436 = vpop.f32.mrb[0].mxu0
        %437 = vmatprep.mubr.f32.mxu0 0.0
        %438 = vmatmul.mubr.f32.gmra.mrb[0].mxu0 %v306
        %v439 = vpop.f32.mrb[0].mxu0
        %v440 = vadd.f32 %v278, %v439
        %v441 = vpop.f32.mrb[0].mxu0
        %442 = vmatprep.mubr.f32.mxu0 0.0
        %443 = vmatmul.mubr.f32.gmra.mrb[0].mxu0 %v309
        %v444 = vpop.f32.mrb[0].mxu0
        %v445 = vadd.f32 %v278, %v444
        %v446 = vpop.f32.mrb[0].mxu0
        %447 = vmatprep.mubr.f32.mxu0 0.0
        %448 = vmatmul.mubr.f32.gmra.mrb[0].mxu0 %v312
        %v449 = vpop.f32.mrb[0].mxu0
        %v450 = vadd.f32 %v278, %v449
        %v451 = vpop.f32.mrb[0].mxu0
        %452 = vmatprep.mubr.f32.mxu0 0.0
        %453 = vmatmul.mubr.f32.gmra.mrb[0].mxu0 %v315
        %v454 = vpop.f32.mrb[0].mxu0
        %v455 = vadd.f32 %v278, %v454
        %v456 = vpop.f32.mrb[0].mxu0
        %457 = vmatprep.mubr.f32.mxu0 0.0
        %458 = vmatmul.mubr.f32.gmra.mrb[0].mxu0 %v318
        %v459 = vpop.f32.mrb[0].mxu0
        %v460 = vadd.f32 %v278, %v459
        %v461 = vpop.f32.mrb[0].mxu0
        %462 = vmatprep.mubr.f32.mxu0 0.0
        %463 = vmatmul.mubr.f32.gmra.mrb[0].mxu0 %v321
        %v464 = vpop.f32.mrb[0].mxu0
        %v465 = vadd.f32 %v278, %v464
        %v466 = vpop.f32.mrb[0].mxu0
        %467 = vmatprep.mubr.f32.mxu0 0.0
        %468 = vmatmul.mubr.f32.gmra.mrb[0].mxu0 %v324
        %v469 = vpop.f32.mrb[0].mxu0
        %v470 = vadd.f32 %v278, %v469
        %v471 = vpop.f32.mrb[0].mxu0
        %472 = vmatprep.mubr.f32.mxu0 0.0
        %473 = vmatmul.mubr.f32.gmra.mrb[0].mxu0 %v327
        %v474 = vpop.f32.mrb[0].mxu0
        %v475 = vadd.f32 %v278, %v474
        %v476 = vpop.f32.mrb[0].mxu0
        %477 = vdwg.mxu0
        %v478 = vmax.f32 %v400, 0.0
        %v479 = vmax.f32 %v405, 0.0
        %v480 = vmax.f32 %v410, 0.0
        %v481 = vmax.f32 %v415, 0.0
        %v482 = vmax.f32 %v420, 0.0
        %v483 = vmax.f32 %v425, 0.0
        %v484 = vmax.f32 %v430, 0.0
        %v485 = vmax.f32 %v435, 0.0
        %v486 = vmax.f32 %v440, 0.0
        %v487 = vmax.f32 %v445, 0.0
        %v488 = vmax.f32 %v450, 0.0
        %v489 = vmax.f32 %v455, 0.0
        %v490 = vmax.f32 %v460, 0.0
        %v491 = vmax.f32 %v465, 0.0
        %v492 = vmax.f32 %v470, 0.0
        %v493 = vmax.f32 %v475, 0.0
        %s494 = smul.u32 %s24, 128
        %v495 = vlaneseq
        %v496 = vshrl.u32 %v495, 7
        %v497 = vadd.s32 %v496, 8
        %v498 = vadd.s32 %v496, 16
        %v499 = vadd.s32 %v496, 24
        %v500 = vadd.s32 %v496, 32
        %v501 = vadd.s32 %v496, 40
        %v502 = vadd.s32 %v496, 48
        %v503 = vadd.s32 %v496, 56
        %v504 = vadd.s32 %v496, 64
        %v505 = vadd.s32 %v496, 72
        %v506 = vadd.s32 %v496, 80
        %v507 = vadd.s32 %v496, 88
        %v508 = vadd.s32 %v496, 96
        %v509 = vadd.s32 %v496, 104
        %v510 = vadd.s32 %v496, 112
        %v511 = vadd.s32 %v496, 120
        %v512 = vstv %s494
        %v513 = vadd.s32 %v512, %v496
        %v514 = vadd.s32 %v512, %v497
        %v515 = vadd.s32 %v512, %v498
        %v516 = vadd.s32 %v512, %v499
        %v517 = vadd.s32 %v512, %v500
        %v518 = vadd.s32 %v512, %v501
        %v519 = vadd.s32 %v512, %v502
        %v520 = vadd.s32 %v512, %v503
        %v521 = vadd.s32 %v512, %v504
        %v522 = vadd.s32 %v512, %v505
        %v523 = vadd.s32 %v512, %v506
        %v524 = vadd.s32 %v512, %v507
        %v525 = vadd.s32 %v512, %v508
        %v526 = vadd.s32 %v512, %v509
        %v527 = vadd.s32 %v512, %v510
        %v528 = vadd.s32 %v512, %v511
        %vm529 = vcmp.lt.s32.totalorder %v513, 256
        %vm530 = vcmp.lt.s32.totalorder %v514, 256
        %vm531 = vcmp.lt.s32.totalorder %v515, 256
        %vm532 = vcmp.lt.s32.totalorder %v516, 256
        %vm533 = vcmp.lt.s32.totalorder %v517, 256
        %vm534 = vcmp.lt.s32.totalorder %v518, 256
        %vm535 = vcmp.lt.s32.totalorder %v519, 256
        %vm536 = vcmp.lt.s32.totalorder %v520, 256
        %vm537 = vcmp.lt.s32.totalorder %v521, 256
        %vm538 = vcmp.lt.s32.totalorder %v522, 256
        %vm539 = vcmp.lt.s32.totalorder %v523, 256
        %vm540 = vcmp.lt.s32.totalorder %v524, 256
        %vm541 = vcmp.lt.s32.totalorder %v525, 256
        %vm542 = vcmp.lt.s32.totalorder %v526, 256
        %vm543 = vcmp.lt.s32.totalorder %v527, 256
        %vm544 = vcmp.lt.s32.totalorder %v528, 256
        %v545 = vsel %vm529, 1, 0
        %v546 = vsel %vm530, 1, 0
        %v547 = vsel %vm531, 1, 0
        %v548 = vsel %vm532, 1, 0
        %v549 = vsel %vm533, 1, 0
        %v550 = vsel %vm534, 1, 0
        %v551 = vsel %vm535, 1, 0
        %v552 = vsel %vm536, 1, 0
        %v553 = vsel %vm537, 1, 0
        %v554 = vsel %vm538, 1, 0
        %v555 = vsel %vm539, 1, 0
        %v556 = vsel %vm540, 1, 0
        %v557 = vsel %vm541, 1, 0
        %v558 = vsel %vm542, 1, 0
        %v559 = vsel %vm543, 1, 0
        %v560 = vsel %vm544, 1, 0
        %vm561 = vcmp.eq.s32.totalorder %v545, 1
        %vm562 = vcmp.eq.s32.totalorder %v546, 1
        %vm563 = vcmp.eq.s32.totalorder %v547, 1
        %vm564 = vcmp.eq.s32.totalorder %v548, 1
        %vm565 = vcmp.eq.s32.totalorder %v549, 1
        %vm566 = vcmp.eq.s32.totalorder %v550, 1
        %vm567 = vcmp.eq.s32.totalorder %v551, 1
        %vm568 = vcmp.eq.s32.totalorder %v552, 1
        %vm569 = vcmp.eq.s32.totalorder %v553, 1
        %vm570 = vcmp.eq.s32.totalorder %v554, 1
        %vm571 = vcmp.eq.s32.totalorder %v555, 1
        %vm572 = vcmp.eq.s32.totalorder %v556, 1
        %vm573 = vcmp.eq.s32.totalorder %v557, 1
        %vm574 = vcmp.eq.s32.totalorder %v558, 1
        %vm575 = vcmp.eq.s32.totalorder %v559, 1
        %vm576 = vcmp.eq.s32.totalorder %v560, 1
        %v577 = vsel %vm561, %v478, 0.0
        %v578 = vsel %vm562, %v479, 0.0
        %v579 = vsel %vm563, %v480, 0.0
        %v580 = vsel %vm564, %v481, 0.0
        %v581 = vsel %vm565, %v482, 0.0
        %v582 = vsel %vm566, %v483, 0.0
        %v583 = vsel %vm567, %v484, 0.0
        %v584 = vsel %vm568, %v485, 0.0
        %v585 = vsel %vm569, %v486, 0.0
        %v586 = vsel %vm570, %v487, 0.0
        %v587 = vsel %vm571, %v488, 0.0
        %v588 = vsel %vm572, %v489, 0.0
        %v589 = vsel %vm573, %v490, 0.0
        %v590 = vsel %vm574, %v491, 0.0
        %v591 = vsel %vm575, %v492, 0.0
        %v592 = vsel %vm576, %v493, 0.0
        %v593 = vld [vmem:[#allocation2] sm:$0x1]
        %vm594 = vcmask 261120
        %v595 = vsel %vm594, %v577, 0.0
        %v596 = vsel %vm594, %v578, 0.0
        %v597 = vadd.f32 %v595, %v596
        %v598 = vsel %vm594, %v579, 0.0
        %v599 = vadd.f32 %v597, %v598
        %v600 = vsel %vm594, %v580, 0.0
        %v601 = vadd.f32 %v599, %v600
        %v602 = vsel %vm594, %v581, 0.0
        %v603 = vadd.f32 %v601, %v602
        %v604 = vsel %vm594, %v582, 0.0
        %v605 = vadd.f32 %v603, %v604
        %v606 = vsel %vm594, %v583, 0.0
        %v607 = vadd.f32 %v605, %v606
        %v608 = vsel %vm594, %v584, 0.0
        %v609 = vadd.f32 %v607, %v608
        %v610 = vsel %vm594, %v585, 0.0
        %v611 = vadd.f32 %v609, %v610
        %v612 = vsel %vm594, %v586, 0.0
        %v613 = vadd.f32 %v611, %v612
        %v614 = vsel %vm594, %v587, 0.0
        %v615 = vadd.f32 %v613, %v614
        %v616 = vsel %vm594, %v588, 0.0
        %v617 = vadd.f32 %v615, %v616
        %v618 = vsel %vm594, %v589, 0.0
        %v619 = vadd.f32 %v617, %v618
        %v620 = vsel %vm594, %v590, 0.0
        %v621 = vadd.f32 %v619, %v620
        %v622 = vsel %vm594, %v591, 0.0
        %v623 = vadd.f32 %v621, %v622
        %v624 = vsel %vm594, %v592, 0.0
        %v625 = vadd.f32 %v623, %v624
        %v626 = vrot.slane %v625, 4
        %v627 = vadd.f32 %v625, %v626
        %v628 = vrot.slane %v627, 2
        %v629 = vadd.f32 %v627, %v628
        %v630 = vrot.slane %v629, 1
        %v631 = vadd.f32 %v629, %v630
        %v632 = vadd.f32 %v593, %v631
        %vm633 = vcmask 253952
        %634 = vst.msk [vmem:[#allocation2] sm:$0x1] %vm633, %v632
        %p635 = scmp.eq.s32.totalorder %s24, 1
        // Predicated region
        $region45: #{tpu_custom_call.1} parent=39 // pred_check
          %p636 = pneg %p635
        $region46: #{tpu_custom_call.1} parent=39 // pred_check_branch
          %638 = sbr.rel (%p636) target = $region48
        $region47: #{tpu_custom_call.1} parent=39 // pred_region
          %v639 = vld [vmem:[#allocation2] sm:$0x1]
          %v640 = vmul.f32 %v639, 0.00390625
          %v641 = vld [vmem:[%s3] sm:$0xff]
          %v642 = vld [vmem:[%s3 + $0x8] sm:$0xff]
          %v643 = vld [vmem:[%s3 + $0x10] sm:$0xff]
          %v644 = vld [vmem:[%s3 + $0x18] sm:$0xff]
          %v645 = vld [vmem:[%s4] sm:$0x1]
          %v647 = vsel %vm594, %v640, 0
          %649 = vmatprep.subr.mxu0 0.0
          %650 = vmatpush1.msra.mxu0 %v641
          %651 = vmatprep.subr.mxu0 0.0
          %652 = vmatpush1.msra.mxu0 %v642
          %653 = vmatprep.subr.mxu0 0.0
          %654 = vmatpush1.msra.mxu0 %v643
          %655 = vmatprep.subr.mxu0 0.0
          %656 = vmatpush1.msra.mxu0 %v644
          %657 = vmatprep.subr.mxu0 0.0
          %658 = vmatpush1.msra.mxu0 0.0
          %659 = vmatprep.subr.mxu0 0.0
          %660 = vmatpush1.msra.mxu0 0.0
          %661 = vmatprep.subr.mxu0 0.0
          %662 = vmatpush1.msra.mxu0 0.0
          %663 = vmatprep.subr.mxu0 0.0
          %664 = vmatpush1.msra.mxu0 0.0
          %665 = vmatprep.subr.mxu0 0.0
          %666 = vmatpush1.msra.mxu0 0.0
          %667 = vmatprep.subr.mxu0 0.0
          %668 = vmatpush1.msra.mxu0 0.0
          %669 = vmatprep.subr.mxu0 0.0
          %670 = vmatpush1.msra.mxu0 0.0
          %671 = vmatprep.subr.mxu0 0.0
          %672 = vmatpush1.msra.mxu0 0.0
          %673 = vmatprep.subr.mxu0 0.0
          %674 = vmatpush1.msra.mxu0 0.0
          %675 = vmatprep.subr.mxu0 0.0
          %676 = vmatpush1.msra.mxu0 0.0
          %677 = vmatprep.subr.mxu0 0.0
          %678 = vmatpush1.msra.mxu0 0.0
          %679 = vmatprep.subr.mxu0 0.0
          %680 = vmatpush1.msra.mxu0 0.0
          %681 = vmatprep.subr.mxu0 0.0
          %682 = vmatpush1.msra.mxu0 0.0
          %683 = vmatprep.subr.mxu0 0.0
          %684 = vmatpush1.msra.mxu0 0.0
          %685 = vmatprep.subr.mxu0 0.0
          %686 = vmatpush1.msra.mxu0 0.0
          %687 = vmatprep.subr.mxu0 0.0
          %688 = vmatpush1.msra.mxu0 0.0
          %689 = vmatprep.subr.mxu0 0.0
          %690 = vmatpush1.msra.mxu0 0.0
          %691 = vmatprep.subr.mxu0 0.0
          %692 = vmatpush1.msra.mxu0 0.0
          %693 = vmatprep.subr.mxu0 0.0
          %694 = vmatpush1.msra.mxu0 0.0
          %695 = vmatprep.subr.mxu0 0.0
          %696 = vmatpush1.msra.mxu0 0.0
          %697 = vmatprep.subr.mxu0 0.0
          %698 = vmatpush1.msra.mxu0 0.0
          %699 = vmatprep.subr.mxu0 0.0
          %700 = vmatpush1.msra.mxu0 0.0
          %701 = vmatprep.subr.mxu0 0.0
          %702 = vmatpush1.msra.mxu0 0.0
          %703 = vmatprep.subr.mxu0 0.0
          %704 = vmatpush1.msra.mxu0 0.0
          %705 = vmatprep.subr.mxu0 0.0
          %706 = vmatpush1.msra.mxu0 0.0
          %707 = vmatprep.subr.mxu0 0.0
          %708 = vmatpush1.msra.mxu0 0.0
          %709 = vmatprep.subr.mxu0 0.0
          %710 = vmatpush1.msra.mxu0 0.0
          %711 = vmatprep.subr.mxu0 0.0
          %712 = vmatpush1.msra.mxu0 0.0
          %713 = vmatprep.mubr.f32.mxu0 0.0
          %714 = vmatmul.mubr.f32.gmra.mrb[0].mxu0 %v647
          %v715 = vpop.f32.mrb[0].mxu0
          %v716 = vadd.f32 %v645, %v715
          %v717 = vpop.f32.mrb[0].mxu0
          %718 = vdwg.mxu0
          %719 = vst [vmem:[%s239] sm:$0x1] %v716
        $region48: #{tpu_custom_call.1} parent=39 // pred_fallthru
          _
        %s720 = sand.u32 %s151, 1
        %s721 = scalar_lea.sflag [#allocation4], %s720
        %s722 = sand.u32 %s151, 1
        %s723 = scalar_lea.vmem [#allocation3], %s722
        // Predicated region
        $region49: #{tpu_custom_call.1} parent=39 // pred_check
          %p724 = pneg %p161
        $region50: #{tpu_custom_call.1} parent=39 // pred_check_branch
          %726 = sbr.rel (%p724) target = $region52
        $region51: #{tpu_custom_call.1} parent=39 // pred_region
          %s728 = ssub.s32 16, 16
          %729 = vsyncadd %s721, %s728
          %s730 = smul.addr %s23, 16
          %s731 = scalar_lea.hbm %s5, %s730
          %s733 = sshll.u32 %s723, 4
          %s734 = int_to_ptr.vmem [resolvable:$true] %s733
          %736 = dma.vmem_to_hbm [thread:$0]  %s734, 16, %s731, %s721
        $region52: #{tpu_custom_call.1} parent=39 // pred_fallthru
          _
      $region40: #{tpu_custom_call.1} parent=5 // pred_fallthru
        _
      %p737 = scmp.le.s32.totalorder 2, %s14
      // Predicated region
      $region53: #{tpu_custom_call.1} parent=5 // pred_check
        %p738 = pneg %p737
      $region54: #{tpu_custom_call.1} parent=5 // pred_check_branch
        %740 = sbr.rel (%p738) target = $region56
      $region55: #{tpu_custom_call.1} parent=5 // pred_region
        %s741 = ssub.s32 %s14, 2
        // Predicated region
        $region57: #{tpu_custom_call.1} parent=55 // pred_check
          %p742 = pneg %p167
        $region58: #{tpu_custom_call.1} parent=55 // pred_check_branch
          %744 = sbr.rel (%p742) target = $region60
        $region59: #{tpu_custom_call.1} parent=55 // pred_region
          %s745 = sand.u32 %s152, 1
          %s746 = scalar_lea.sflag [#allocation4], %s745
          %s747 = sand.u32 %s152, 1
          %s748 = scalar_lea.vmem [#allocation3], %s747
          %749 = dma.done %s746, 16
        $region60: #{tpu_custom_call.1} parent=55 // pred_fallthru
          _
      $region56: #{tpu_custom_call.1} parent=5 // pred_fallthru
        _
    $region6: #{tpu_custom_call.1} parent=1 // loop_footer
      %s18 = sadd.s32 1, %s14
    $region7: #{tpu_custom_call.1} parent=1 // loop_footer_branch
      %13 = sbr.rel target = $region3
    $region8: #{tpu_custom_call.1} parent=1 // loop_exit
      _
    %750 = vsyncpa [#allocation4], 1
    %s751 = scalar_lea.sflag [#allocation4], 1
    %752 = vsyncpa %s751, 1

</llo_original>
